<compile_context>
chip_gen: v5e
topology: v5e:2x2
jax: 0.10.0
libtpu: 0.0.40
codegen_flags: <defaults>
</compile_context>

<pallas_src>
import functools

import jax
import jax.numpy as jnp
from jax.experimental import pallas as pl
from jax.experimental.pallas import tpu as pltpu


def _attn_agg_kernel(TB, K,
                     x_ref, neibs_ref, mask_ref,
                     att_w1_ref, att_w2_ref,
                     fcx_w_ref, fcn_w_ref,
                     out_ref):
    """One row tile (TB nodes, TB*K neighbors) of the forward pass."""
    x = x_ref[...]                       # [TB, D]
    nb = neibs_ref[...]                  # [TB*K, D]
    w1 = att_w1_ref[...]                 # [D, H]
    w2 = att_w2_ref[...]                 # [H, H]

    # Shared attention MLP (same weights for neighbors and nodes).
    h_n = jnp.tanh(jnp.dot(nb, w1, preferred_element_type=jnp.float32))
    neib_att = jnp.dot(h_n, w2, preferred_element_type=jnp.float32)   # [TB*K, H]
    h_x = jnp.tanh(jnp.dot(x, w1, preferred_element_type=jnp.float32))
    x_att = jnp.dot(h_x, w2, preferred_element_type=jnp.float32)      # [TB, H]

    # ws[b, k] = <neib_att[b, k, :], x_att[b, :]>  (the bmm in the module).
    # Broadcast-multiply + lane reduce (VPU + XLU), not K tiny MXU matmuls.
    H = x_att.shape[-1]
    neib_att3 = neib_att.reshape(TB, K, H)
    ws = jnp.sum(neib_att3 * x_att[:, None, :], axis=-1)              # [TB, K]

    # Mask invalid neighbor slots: ws += -9999999 * mask
    ws = ws + (-9999999.0) * mask_ref[...]

    # Softmax over the neighbor axis; approx reciprocal lowers to the EUP slot.
    ws = ws - jnp.max(ws, axis=1, keepdims=True)
    ws = jnp.exp(ws)
    ws = ws * pl.reciprocal(jnp.sum(ws, axis=1, keepdims=True), approx=True)

    # Weighted aggregation of neighbors: agg[b,:] = sum_k ws[b,k] * neibs[b,k,:]
    D = nb.shape[-1]
    neibs3 = nb.reshape(TB, K, D)
    agg = jnp.sum(ws[:, :, None] * neibs3, axis=1)                    # [TB, D]

    # out = fc_x(x) + fc_neib(agg); activation = ReLU (dropout identity, eval).
    out = (jnp.dot(x, fcx_w_ref[...], preferred_element_type=jnp.float32)
           + jnp.dot(agg, fcn_w_ref[...], preferred_element_type=jnp.float32))
    # NOTE: output_dim (=32 here) < 128 lanes -> masked stores; padding the
    # feature dim to 128 would help only if the consumer tolerates it.
    out_ref[...] = jnp.maximum(out, 0.0).astype(out_ref.dtype)


def attention_aggregator(x, neibs, edge_emb, mask, params, *, K, row_tile=8):
    """Pallas-backed AttentionAggregator forward (eval mode, ReLU activation).

    `edge_emb` is accepted but unused — exactly as in the PyTorch forward.
    """
    del edge_emb  # unused by the module's forward
    B, D = x.shape
    H = params["att_w2"].shape[1]
    O = params["fcx_w"].shape[1]
    assert neibs.shape == (B * K, D)
    assert mask.shape == (B, K)

    # Row tile: multiple of 8 sublanes when possible, else fall back to full B.
    TB = row_tile if (B % row_tile == 0 and row_tile % 8 == 0) else B
    grid = (B // TB,)

    mask = mask.astype(jnp.float32)

    def row_map(i):
        return (i, 0)

    def const_map(i):
        return (0, 0)

    # Advisory cost estimate for the XLA scheduler.
    flops = int(2 * (B * K + B) * (D * H + H * H)      # attention MLPs
                + 2 * B * K * H                        # attention scores
                + 2 * B * K * D                        # weighted aggregation
                + 2 * B * D * O * 2)                   # fc_x + fc_neib
    transcendentals = int((B * K + B) * H + B * K)     # tanh + exp
    weight_elems = sum(int(p.size) for p in params.values())
    bytes_accessed = int(4 * (x.size + neibs.size + mask.size + B * O + weight_elems))

    # VMEM budget: double-buffered row tiles + resident weights, with headroom.
    tile_bytes = 4 * (TB * D + TB * K * D + TB * K + TB * O)
    vmem_limit = int(min(max(4 * tile_bytes + 2 * 4 * weight_elems, 4 << 20), 64 << 20))

    kernel = functools.partial(_attn_agg_kernel, TB, K)
    return pl.pallas_call(
        kernel,
        out_shape=jax.ShapeDtypeStruct((B, O), jnp.float32),
        grid_spec=pltpu.PrefetchScalarGridSpec(
            num_scalar_prefetch=0,
            grid=grid,
            in_specs=[
                pl.BlockSpec((TB, D), row_map),        # x        (tiled by rows)
                pl.BlockSpec((TB * K, D), row_map),    # neibs    (K rows per node)
                pl.BlockSpec((TB, K), row_map),        # mask
                pl.BlockSpec((D, H), const_map),       # att_w1   (VMEM-resident)
                pl.BlockSpec((H, H), const_map),       # att_w2   (VMEM-resident)
                pl.BlockSpec((D, O), const_map),       # fc_x     (VMEM-resident)
                pl.BlockSpec((D, O), const_map),       # fc_neib  (VMEM-resident)
            ],
            out_specs=pl.BlockSpec((TB, O), row_map),
        ),
        compiler_params=pltpu.CompilerParams(
            dimension_semantics=("parallel",),
            vmem_limit_bytes=vmem_limit,
        ),
        cost_estimate=pl.CostEstimate(flops=flops,
                                      transcendentals=transcendentals,
                                      bytes_accessed=bytes_accessed),
    )(x, neibs, mask,
      params["att_w1"], params["att_w2"],
      params["fcx_w"], params["fcn_w"])


def reference_forward(x, neibs, mask, params, *, K):
    """Pure-JAX reference mirroring the PyTorch module (eval mode, ReLU)."""
    B = x.shape[0]
    neib_att = jnp.tanh(neibs @ params["att_w1"]) @ params["att_w2"]
    x_att = jnp.tanh(x @ params["att_w1"]) @ params["att_w2"]
    ws = jnp.einsum("bkh,bh->bk", neib_att.reshape(B, K, -1), x_att)
    ws = ws + (-9999999.0) * mask
    ws = jax.nn.softmax(ws, axis=1)
    agg = jnp.einsum("bk,bkd->bd", ws, neibs.reshape(B, K, -1))
    out = x @ params["fcx_w"] + agg @ params["fcn_w"]
    return jnp.maximum(out, 0.0)


if __name__ == "__main__":
    # Small shapes consistent with the module (hidden_dim default = 32).
    B = 16    # nodes (batch)
    K = 8     # neighbors per node
    D = 32    # input_dim
    H = 32    # hidden_dim
    O = 32    # output_dim
    E = 16    # edge_dim (edge_emb is unused by forward)

    key = jax.random.PRNGKey(0)
    ks = jax.random.split(key, 8)
    scale = 0.1
    params = {
        "att_w1": scale * jax.random.normal(ks[0], (D, H), jnp.float32),
        "att_w2": scale * jax.random.normal(ks[1], (H, H), jnp.float32),
        "fcx_w":  scale * jax.random.normal(ks[2], (D, O), jnp.float32),
        "fcn_w":  scale * jax.random.normal(ks[3], (D, O), jnp.float32),
    }
    x = jax.random.normal(ks[4], (B, D), jnp.float32)
    neibs = jax.random.normal(ks[5], (B * K, D), jnp.float32)
    edge_emb = jax.random.normal(ks[6], (B * K, E), jnp.float32)   # unused by forward
    mask = (jax.random.uniform(ks[7], (B, K)) < 0.25).astype(jnp.float32)
    mask = mask.at[:, 0].set(0.0)   # keep at least one valid neighbor per node

    out = attention_aggregator(x, neibs, edge_emb, mask, params, K=K)
    out = jax.block_until_ready(out)

    ref = reference_forward(x, neibs, mask, params, K=K)
    assert out.shape == (B, O), out.shape
    max_err = float(jnp.max(jnp.abs(out - ref)))
    # Tolerance slightly above 1e-4 to cover the approx (EUP) softmax reciprocal.
    assert jnp.allclose(out, ref, atol=2e-3, rtol=2e-3), max_err

    print("KERNEL_OK")
</pallas_src>

<mosaic_0001>
module attributes {stable_mosaic.version = 11 : i64} {
  func.func @_attn_agg_kernel(%arg0: i32, %arg1: memref<8x32xf32, #tpu.memory_space<vmem>>, %arg2: memref<64x32xf32, #tpu.memory_space<vmem>>, %arg3: memref<8x8xf32, #tpu.memory_space<vmem>>, %arg4: memref<32x32xf32, #tpu.memory_space<vmem>>, %arg5: memref<32x32xf32, #tpu.memory_space<vmem>>, %arg6: memref<32x32xf32, #tpu.memory_space<vmem>>, %arg7: memref<32x32xf32, #tpu.memory_space<vmem>>, %arg8: memref<8x32xf32, #tpu.memory_space<vmem>>) attributes {dimension_semantics = [#tpu.dimension_semantics<parallel>], iteration_bounds = array<i64: 2>, scalar_prefetch = 0 : i64, scratch_operands = 0 : i64, tpu.core_type = #tpu.core_type<tc>, window_params = [{transform_indices = @transform_0, window_bounds = array<i64: 8, 32>}, {transform_indices = @transform_1, window_bounds = array<i64: 64, 32>}, {transform_indices = @transform_2, window_bounds = array<i64: 8, 8>}, {pipeline_mode = #tpu.pipeline_mode<synchronous>, transform_indices = @transform_3, window_bounds = array<i64: 32, 32>}, {pipeline_mode = #tpu.pipeline_mode<synchronous>, transform_indices = @transform_4, window_bounds = array<i64: 32, 32>}, {pipeline_mode = #tpu.pipeline_mode<synchronous>, transform_indices = @transform_5, window_bounds = array<i64: 32, 32>}, {pipeline_mode = #tpu.pipeline_mode<synchronous>, transform_indices = @transform_6, window_bounds = array<i64: 32, 32>}, {transform_indices = @transform_7, window_bounds = array<i64: 8, 32>}]} {
    %c0 = arith.constant 0 : index
    %c0_0 = arith.constant 0 : index
    %0 = vector.load %arg1[%c0, %c0_0] : memref<8x32xf32, #tpu.memory_space<vmem>>, vector<8x32xf32>
    %c0_1 = arith.constant 0 : index
    %c0_2 = arith.constant 0 : index
    %1 = vector.load %arg2[%c0_1, %c0_2] : memref<64x32xf32, #tpu.memory_space<vmem>>, vector<64x32xf32>
    %c0_3 = arith.constant 0 : index
    %c0_4 = arith.constant 0 : index
    %2 = vector.load %arg4[%c0_3, %c0_4] : memref<32x32xf32, #tpu.memory_space<vmem>>, vector<32x32xf32>
    %c0_5 = arith.constant 0 : index
    %c0_6 = arith.constant 0 : index
    %3 = vector.load %arg5[%c0_5, %c0_6] : memref<32x32xf32, #tpu.memory_space<vmem>>, vector<32x32xf32>
    %cst = arith.constant dense<0.000000e+00> : vector<64x32xf32>
    %4 = tpu.matmul %1, %2, %cst {dimension_numbers = #tpu.dot_dimension_numbers<[1], [0], [0], [1], [0, 0, 1, 1], [], []>} : vector<64x32xf32>, vector<32x32xf32>, vector<64x32xf32> -> vector<64x32xf32>
    %5 = math.tanh %4 : vector<64x32xf32>
    %cst_7 = arith.constant dense<0.000000e+00> : vector<64x32xf32>
    %6 = tpu.matmul %5, %3, %cst_7 {dimension_numbers = #tpu.dot_dimension_numbers<[1], [0], [0], [1], [0, 0, 1, 1], [], []>} : vector<64x32xf32>, vector<32x32xf32>, vector<64x32xf32> -> vector<64x32xf32>
    %cst_8 = arith.constant dense<0.000000e+00> : vector<8x32xf32>
    %7 = tpu.matmul %0, %2, %cst_8 {dimension_numbers = #tpu.dot_dimension_numbers<[1], [0], [0], [1], [0, 0, 1, 1], [], []>} : vector<8x32xf32>, vector<32x32xf32>, vector<8x32xf32> -> vector<8x32xf32>
    %8 = math.tanh %7 : vector<8x32xf32>
    %cst_9 = arith.constant dense<0.000000e+00> : vector<8x32xf32>
    %9 = tpu.matmul %8, %3, %cst_9 {dimension_numbers = #tpu.dot_dimension_numbers<[1], [0], [0], [1], [0, 0, 1, 1], [], []>} : vector<8x32xf32>, vector<32x32xf32>, vector<8x32xf32> -> vector<8x32xf32>
    %10 = vector.shape_cast %6 : vector<64x32xf32> to vector<8x8x32xf32>
    %11 = vector.shape_cast %9 : vector<8x32xf32> to vector<8x1x32xf32>
    %12 = vector.broadcast %11 : vector<8x1x32xf32> to vector<8x8x32xf32>
    %13 = arith.mulf %10, %12 : vector<8x8x32xf32>
    %cst_10 = arith.constant dense<0.000000e+00> : vector<8x8xf32>
    %14 = vector.multi_reduction <add>, %13, %cst_10 [2] : vector<8x8x32xf32> to vector<8x8xf32>
    %c0_11 = arith.constant 0 : index
    %c0_12 = arith.constant 0 : index
    %15 = vector.load %arg3[%c0_11, %c0_12] : memref<8x8xf32, #tpu.memory_space<vmem>>, vector<8x8xf32>
    %cst_13 = arith.constant 0xCB18967F : f32
    %16 = vector.broadcast %cst_13 : f32 to vector<8x8xf32>
    %17 = arith.mulf %16, %15 : vector<8x8xf32>
    %18 = arith.addf %14, %17 : vector<8x8xf32>
    %cst_14 = arith.constant dense<0xFF800000> : vector<8xf32>
    %19 = vector.multi_reduction <maximumf>, %18, %cst_14 [1] : vector<8x8xf32> to vector<8xf32>
    %20 = vector.shape_cast %19 : vector<8xf32> to vector<8x1xf32>
    %21 = vector.broadcast %20 : vector<8x1xf32> to vector<8x8xf32>
    %22 = arith.subf %18, %21 : vector<8x8xf32>
    %23 = math.exp %22 : vector<8x8xf32>
    %cst_15 = arith.constant dense<0.000000e+00> : vector<8xf32>
    %24 = vector.multi_reduction <add>, %23, %cst_15 [1] : vector<8x8xf32> to vector<8xf32>
    %25 = vector.shape_cast %24 : vector<8xf32> to vector<8x1xf32>
    %26 = tpu.reciprocal %25 {approx = true} : vector<8x1xf32> -> vector<8x1xf32>
    %27 = vector.broadcast %26 : vector<8x1xf32> to vector<8x8xf32>
    %28 = arith.mulf %23, %27 : vector<8x8xf32>
    %29 = vector.shape_cast %1 : vector<64x32xf32> to vector<8x8x32xf32>
    %30 = vector.shape_cast %28 : vector<8x8xf32> to vector<8x8x1xf32>
    %31 = vector.broadcast %30 : vector<8x8x1xf32> to vector<8x8x32xf32>
    %32 = arith.mulf %31, %29 : vector<8x8x32xf32>
    %cst_16 = arith.constant dense<0.000000e+00> : vector<8x32xf32>
    %33 = vector.multi_reduction <add>, %32, %cst_16 [1] : vector<8x8x32xf32> to vector<8x32xf32>
    %c0_17 = arith.constant 0 : index
    %c0_18 = arith.constant 0 : index
    %34 = vector.load %arg6[%c0_17, %c0_18] : memref<32x32xf32, #tpu.memory_space<vmem>>, vector<32x32xf32>
    %cst_19 = arith.constant dense<0.000000e+00> : vector<8x32xf32>
    %35 = tpu.matmul %0, %34, %cst_19 {dimension_numbers = #tpu.dot_dimension_numbers<[1], [0], [0], [1], [0, 0, 1, 1], [], []>} : vector<8x32xf32>, vector<32x32xf32>, vector<8x32xf32> -> vector<8x32xf32>
    %c0_20 = arith.constant 0 : index
    %c0_21 = arith.constant 0 : index
    %36 = vector.load %arg7[%c0_20, %c0_21] : memref<32x32xf32, #tpu.memory_space<vmem>>, vector<32x32xf32>
    %cst_22 = arith.constant dense<0.000000e+00> : vector<8x32xf32>
    %37 = tpu.matmul %33, %36, %cst_22 {dimension_numbers = #tpu.dot_dimension_numbers<[1], [0], [0], [1], [0, 0, 1, 1], [], []>} : vector<8x32xf32>, vector<32x32xf32>, vector<8x32xf32> -> vector<8x32xf32>
    %38 = arith.addf %35, %37 : vector<8x32xf32>
    %cst_23 = arith.constant 0.000000e+00 : f32
    %39 = vector.broadcast %cst_23 : f32 to vector<8x32xf32>
    %40 = arith.maximumf %38, %39 : vector<8x32xf32>
    %c0_24 = arith.constant 0 : index
    %c0_25 = arith.constant 0 : index
    %41 = vector.load %arg8[%c0_24, %c0_25] : memref<8x32xf32, #tpu.memory_space<vmem>>, vector<8x32xf32>
    tpu.vector_store %arg8[%c0_24, %c0_25], %40 {strides = array<i32>} : memref<8x32xf32, #tpu.memory_space<vmem>>, vector<8x32xf32>,
    return
  }
  func.func @transform_0(%arg0: i32) -> (i32, i32) {
    %c0_i32 = arith.constant 0 : i32
    %c0_i32_0 = arith.constant 0 : i32
    return %arg0, %c0_i32 : i32, i32
  }
  func.func @transform_1(%arg0: i32) -> (i32, i32) {
    %c0_i32 = arith.constant 0 : i32
    %c0_i32_0 = arith.constant 0 : i32
    return %arg0, %c0_i32 : i32, i32
  }
  func.func @transform_2(%arg0: i32) -> (i32, i32) {
    %c0_i32 = arith.constant 0 : i32
    %c0_i32_0 = arith.constant 0 : i32
    return %arg0, %c0_i32 : i32, i32
  }
  func.func @transform_3(%arg0: i32) -> (i32, i32) {
    %c0_i32 = arith.constant 0 : i32
    %c0_i32_0 = arith.constant 0 : i32
    %c0_i32_1 = arith.constant 0 : i32
    return %c0_i32, %c0_i32_0 : i32, i32
  }
  func.func @transform_4(%arg0: i32) -> (i32, i32) {
    %c0_i32 = arith.constant 0 : i32
    %c0_i32_0 = arith.constant 0 : i32
    %c0_i32_1 = arith.constant 0 : i32
    return %c0_i32, %c0_i32_0 : i32, i32
  }
  func.func @transform_5(%arg0: i32) -> (i32, i32) {
    %c0_i32 = arith.constant 0 : i32
    %c0_i32_0 = arith.constant 0 : i32
    %c0_i32_1 = arith.constant 0 : i32
    return %c0_i32, %c0_i32_0 : i32, i32
  }
  func.func @transform_6(%arg0: i32) -> (i32, i32) {
    %c0_i32 = arith.constant 0 : i32
    %c0_i32_0 = arith.constant 0 : i32
    %c0_i32_1 = arith.constant 0 : i32
    return %c0_i32, %c0_i32_0 : i32, i32
  }
  func.func @transform_7(%arg0: i32) -> (i32, i32) {
    %c0_i32 = arith.constant 0 : i32
    %c0_i32_0 = arith.constant 0 : i32
    return %arg0, %c0_i32 : i32, i32
  }
}

</mosaic_0001>

<llo_original>
// kernel: tpu_custom_call.1
$region0: #{tpu_custom_call.1}
  #allocation0 [shape = 'u32[]', space=smem, size = 0x4, offset = 0x4, fixed_abs, tag = 'smem constant byte address 0x4 - core index']
  #allocation1 [shape = 'u32[72,128]{1,0:T(1,128)}', space=vmem, size = 0x9000, scoped, tag = 'internal scratch']
  %s0 = inlined_call_operand.vmem [shape: f32[16,32], index: 0, kind: input, shape index: {}]
  %s1 = inlined_call_operand.vmem [shape: f32[128,32], index: 1, kind: input, shape index: {}]
  %s2 = inlined_call_operand.vmem [shape: f32[16,8], index: 2, kind: input, shape index: {}]
  %s3 = inlined_call_operand.vmem [shape: f32[32,32], index: 3, kind: input, shape index: {}]
  %s4 = inlined_call_operand.vmem [shape: f32[32,32], index: 4, kind: input, shape index: {}]
  %s5 = inlined_call_operand.vmem [shape: f32[32,32], index: 5, kind: input, shape index: {}]
  %s6 = inlined_call_operand.vmem [shape: f32[32,32], index: 6, kind: input, shape index: {}]
  %s7 = inlined_call_operand.hbm [shape: f32[16,32], index: 7, kind: output, shape index: {}]
  %s8 = sld [smem:[#allocation0]]
  $region61: #{tpu_custom_call.1} parent=0
    _
  %s10 = ssub.s32 1, %s8
  %s11 = scalar_select 0, %s10, %s8
  $region1: #{tpu_custom_call.1} parent=0
    #allocation2 [shape = 'u8[8192]{0}', space=vmem, size = 0x2000, scoped, tag = 'output window, operand 0']
    #allocation3 [shape = 's32[2]{0}', space=sflag, size = 0x8, scoped, tag = 'scoped memory for tpu_custom_call.1']
    %12 = vsyncpa [#allocation3], 0
    %s13 = scalar_lea.sflag [#allocation3], 1
    %14 = vsyncpa %s13, 0
    loop: start=0, step=1, limit=4
    $region2: #{tpu_custom_call.1} parent=1 // loop_pre_header
      _
    $region3: #{tpu_custom_call.1} parent=1 // loop_header
      %s16 = sphi 0, %s20
      %p17 = scmp.ge.s32.totalorder %s16, 4
      %s26 = sphi 0, %s28
      %s29 = sphi 0, %s26
      %s30 = sphi 0, %s29
      %s46 = sphi 0, %s30
      %s52 = sphi 0, %s54
      %s55 = sphi 0, %s52
      %s56 = sphi 0, %s55
      %s72 = sphi 0, %s56
      %s78 = sphi 0, %s80
      %s81 = sphi 0, %s78
      %s82 = sphi 0, %s81
      %s98 = sphi 0, %s82
      %s102 = sphi 0, %s102
      %s104 = sphi 0, %s102
      %s105 = sphi 0, %s104
      %s119 = sphi 0, %s105
      %s123 = sphi 0, %s123
      %s125 = sphi 0, %s123
      %s126 = sphi 0, %s125
      %s140 = sphi 0, %s126
      %s144 = sphi 0, %s144
      %s146 = sphi 0, %s144
      %s147 = sphi 0, %s146
      %s161 = sphi 0, %s147
      %s165 = sphi 0, %s165
      %s167 = sphi 0, %s165
      %s168 = sphi 0, %s167
      %s182 = sphi 0, %s168
      %s188 = sphi 0, %s190
      %s191 = sphi 0, %s188
      %s192 = sphi 0, %s191
      %s208 = sphi 0, %s192
    $region4: #{tpu_custom_call.1} parent=1 // loop_header_branch
      %19 = sbr.rel (%p17) target = $region8
    $region5: #{tpu_custom_call.1} parent=1 // loop_body
      %s21 = ssub.s32 %s16, 1
      %s22 = ssub.s32 %s16, 2
      %s23 = sadd.s32 %s16, 1
      %s24 = ssub.s32 %s16, %s23
      %p25 = scmp.eq.s32.totalorder %s24, 0
      %s27 = sadd.s32 %s26, 1
      %s28 = scalar_select %p25, %s26, %s27
      %p31 = pneg %p25
      %p32 = scmp.eq.s32.totalorder %s16, 1
      %p33 = por %p31, %p32
      %p34 = scmp.ne.s32.totalorder %s26, %s29
      %p35 = scmp.eq.s32.totalorder %s16, 0
      %p36 = por %p34, %p35
      %p37 = scmp.ne.s32.totalorder %s26, %s29
      %p38 = scmp.eq.s32.totalorder %s21, 1
      %p39 = por %p37, %p38
      %p40 = scmp.ne.s32.totalorder %s29, %s30
      %p41 = scmp.eq.s32.totalorder %s21, 0
      %p42 = por %p40, %p41
      %p43 = scmp.ne.s32.totalorder %s29, %s30
      %p44 = scmp.eq.s32.totalorder %s22, 1
      %p45 = por %p43, %p44
      %p47 = scmp.ne.s32.totalorder %s30, %s46
      %p48 = scmp.eq.s32.totalorder %s22, 0
      %p49 = por %p47, %p48
      %s50 = ssub.s32 %s16, %s23
      %p51 = scmp.eq.s32.totalorder %s50, 0
      %s53 = sadd.s32 %s52, 1
      %s54 = scalar_select %p51, %s52, %s53
      %p57 = pneg %p51
      %p58 = scmp.eq.s32.totalorder %s16, 1
      %p59 = por %p57, %p58
      %p60 = scmp.ne.s32.totalorder %s52, %s55
      %p61 = scmp.eq.s32.totalorder %s16, 0
      %p62 = por %p60, %p61
      %p63 = scmp.ne.s32.totalorder %s52, %s55
      %p64 = scmp.eq.s32.totalorder %s21, 1
      %p65 = por %p63, %p64
      %p66 = scmp.ne.s32.totalorder %s55, %s56
      %p67 = scmp.eq.s32.totalorder %s21, 0
      %p68 = por %p66, %p67
      %p69 = scmp.ne.s32.totalorder %s55, %s56
      %p70 = scmp.eq.s32.totalorder %s22, 1
      %p71 = por %p69, %p70
      %p73 = scmp.ne.s32.totalorder %s56, %s72
      %p74 = scmp.eq.s32.totalorder %s22, 0
      %p75 = por %p73, %p74
      %s76 = ssub.s32 %s16, %s23
      %p77 = scmp.eq.s32.totalorder %s76, 0
      %s79 = sadd.s32 %s78, 1
      %s80 = scalar_select %p77, %s78, %s79
      %p83 = pneg %p77
      %p84 = scmp.eq.s32.totalorder %s16, 1
      %p85 = por %p83, %p84
      %p86 = scmp.ne.s32.totalorder %s78, %s81
      %p87 = scmp.eq.s32.totalorder %s16, 0
      %p88 = por %p86, %p87
      %p89 = scmp.ne.s32.totalorder %s78, %s81
      %p90 = scmp.eq.s32.totalorder %s21, 1
      %p91 = por %p89, %p90
      %p92 = scmp.ne.s32.totalorder %s81, %s82
      %p93 = scmp.eq.s32.totalorder %s21, 0
      %p94 = por %p92, %p93
      %p95 = scmp.ne.s32.totalorder %s81, %s82
      %p96 = scmp.eq.s32.totalorder %s22, 1
      %p97 = por %p95, %p96
      %p99 = scmp.ne.s32.totalorder %s82, %s98
      %p100 = scmp.eq.s32.totalorder %s22, 0
      %p101 = por %p99, %p100
      %s103 = sadd.s32 %s102, 1
      %p106 = scmp.eq.s32.totalorder %s16, 1
      %p107 = scmp.ne.s32.totalorder %s102, %s104
      %p108 = scmp.eq.s32.totalorder %s16, 0
      %p109 = por %p107, %p108
      %p110 = scmp.ne.s32.totalorder %s102, %s104
      %p111 = scmp.eq.s32.totalorder %s21, 1
      %p112 = por %p110, %p111
      %p113 = scmp.ne.s32.totalorder %s104, %s105
      %p114 = scmp.eq.s32.totalorder %s21, 0
      %p115 = por %p113, %p114
      %p116 = scmp.ne.s32.totalorder %s104, %s105
      %p117 = scmp.eq.s32.totalorder %s22, 1
      %p118 = por %p116, %p117
      %p120 = scmp.ne.s32.totalorder %s105, %s119
      %p121 = scmp.eq.s32.totalorder %s22, 0
      %p122 = por %p120, %p121
      %s124 = sadd.s32 %s123, 1
      %p127 = scmp.eq.s32.totalorder %s16, 1
      %p128 = scmp.ne.s32.totalorder %s123, %s125
      %p129 = scmp.eq.s32.totalorder %s16, 0
      %p130 = por %p128, %p129
      %p131 = scmp.ne.s32.totalorder %s123, %s125
      %p132 = scmp.eq.s32.totalorder %s21, 1
      %p133 = por %p131, %p132
      %p134 = scmp.ne.s32.totalorder %s125, %s126
      %p135 = scmp.eq.s32.totalorder %s21, 0
      %p136 = por %p134, %p135
      %p137 = scmp.ne.s32.totalorder %s125, %s126
      %p138 = scmp.eq.s32.totalorder %s22, 1
      %p139 = por %p137, %p138
      %p141 = scmp.ne.s32.totalorder %s126, %s140
      %p142 = scmp.eq.s32.totalorder %s22, 0
      %p143 = por %p141, %p142
      %s145 = sadd.s32 %s144, 1
      %p148 = scmp.eq.s32.totalorder %s16, 1
      %p149 = scmp.ne.s32.totalorder %s144, %s146
      %p150 = scmp.eq.s32.totalorder %s16, 0
      %p151 = por %p149, %p150
      %p152 = scmp.ne.s32.totalorder %s144, %s146
      %p153 = scmp.eq.s32.totalorder %s21, 1
      %p154 = por %p152, %p153
      %p155 = scmp.ne.s32.totalorder %s146, %s147
      %p156 = scmp.eq.s32.totalorder %s21, 0
      %p157 = por %p155, %p156
      %p158 = scmp.ne.s32.totalorder %s146, %s147
      %p159 = scmp.eq.s32.totalorder %s22, 1
      %p160 = por %p158, %p159
      %p162 = scmp.ne.s32.totalorder %s147, %s161
      %p163 = scmp.eq.s32.totalorder %s22, 0
      %p164 = por %p162, %p163
      %s166 = sadd.s32 %s165, 1
      %p169 = scmp.eq.s32.totalorder %s16, 1
      %p170 = scmp.ne.s32.totalorder %s165, %s167
      %p171 = scmp.eq.s32.totalorder %s16, 0
      %p172 = por %p170, %p171
      %p173 = scmp.ne.s32.totalorder %s165, %s167
      %p174 = scmp.eq.s32.totalorder %s21, 1
      %p175 = por %p173, %p174
      %p176 = scmp.ne.s32.totalorder %s167, %s168
      %p177 = scmp.eq.s32.totalorder %s21, 0
      %p178 = por %p176, %p177
      %p179 = scmp.ne.s32.totalorder %s167, %s168
      %p180 = scmp.eq.s32.totalorder %s22, 1
      %p181 = por %p179, %p180
      %p183 = scmp.ne.s32.totalorder %s168, %s182
      %p184 = scmp.eq.s32.totalorder %s22, 0
      %p185 = por %p183, %p184
      %s186 = ssub.s32 %s16, %s23
      %p187 = scmp.eq.s32.totalorder %s186, 0
      %s189 = sadd.s32 %s188, 1
      %s190 = scalar_select %p187, %s188, %s189
      %p193 = pneg %p187
      %p194 = scmp.eq.s32.totalorder %s16, 1
      %p195 = por %p193, %p194
      %p196 = scmp.ne.s32.totalorder %s188, %s191
      %p197 = scmp.eq.s32.totalorder %s16, 0
      %p198 = por %p196, %p197
      %p199 = scmp.ne.s32.totalorder %s188, %s191
      %p200 = scmp.eq.s32.totalorder %s21, 1
      %p201 = por %p199, %p200
      %p202 = scmp.ne.s32.totalorder %s191, %s192
      %p203 = scmp.eq.s32.totalorder %s21, 0
      %p204 = por %p202, %p203
      %p205 = scmp.ne.s32.totalorder %s191, %s192
      %p206 = scmp.eq.s32.totalorder %s22, 1
      %p207 = por %p205, %p206
      %p209 = scmp.ne.s32.totalorder %s192, %s208
      %p210 = scmp.eq.s32.totalorder %s22, 0
      %p211 = por %p209, %p210
      %p212 = scmp.le.s32.totalorder 1, %s16
      %p213 = scmp.lt.s32.totalorder %s16, 3
      %p214 = pnand %p212, %p213
      %p215 = pneg %p214
      // Predicated region
      $region9: #{tpu_custom_call.1} parent=5 // pred_check
        _
      $region10: #{tpu_custom_call.1} parent=5 // pred_check_branch
        %217 = sbr.rel (%p214) target = $region12
      $region11: #{tpu_custom_call.1} parent=5 // pred_region
        %s218 = ssub.s32 %s16, 1
        // Predicated region
        $region13: #{tpu_custom_call.1} parent=11 // pred_check
          %p219 = pneg %p115
        $region14: #{tpu_custom_call.1} parent=11 // pred_check_branch
          %221 = sbr.rel (%p219) target = $region16
        $region15: #{tpu_custom_call.1} parent=11 // pred_region
          _
        $region16: #{tpu_custom_call.1} parent=11 // pred_fallthru
          _
        // Predicated region
        $region17: #{tpu_custom_call.1} parent=11 // pred_check
          %p222 = pneg %p136
        $region18: #{tpu_custom_call.1} parent=11 // pred_check_branch
          %224 = sbr.rel (%p222) target = $region20
        $region19: #{tpu_custom_call.1} parent=11 // pred_region
          _
        $region20: #{tpu_custom_call.1} parent=11 // pred_fallthru
          _
        // Predicated region
        $region21: #{tpu_custom_call.1} parent=11 // pred_check
          %p225 = pneg %p157
        $region22: #{tpu_custom_call.1} parent=11 // pred_check_branch
          %227 = sbr.rel (%p225) target = $region24
        $region23: #{tpu_custom_call.1} parent=11 // pred_region
          _
        $region24: #{tpu_custom_call.1} parent=11 // pred_fallthru
          _
        // Predicated region
        $region25: #{tpu_custom_call.1} parent=11 // pred_check
          %p228 = pneg %p178
        $region26: #{tpu_custom_call.1} parent=11 // pred_check_branch
          %230 = sbr.rel (%p228) target = $region28
        $region27: #{tpu_custom_call.1} parent=11 // pred_region
          _
        $region28: #{tpu_custom_call.1} parent=11 // pred_fallthru
          _
      $region12: #{tpu_custom_call.1} parent=5 // pred_fallthru
        _
      %p231 = scmp.lt.s32.totalorder %s16, 2
      // Predicated region
      $region29: #{tpu_custom_call.1} parent=5 // pred_check
        %p232 = pneg %p231
      $region30: #{tpu_custom_call.1} parent=5 // pred_check_branch
        %234 = sbr.rel (%p232) target = $region32
      $region31: #{tpu_custom_call.1} parent=5 // pred_region
        // Predicated region
        $region33: #{tpu_custom_call.1} parent=31 // pred_check
          %p235 = pneg %p36
        $region34: #{tpu_custom_call.1} parent=31 // pred_check_branch
          %237 = sbr.rel (%p235) target = $region36
        $region35: #{tpu_custom_call.1} parent=31 // pred_region
          %p238 = scmp.lt.s32.totalorder %s16, 1
          %s239 = scalar_select %p238, %s16, 1
          %s240 = smul.addr %s239, 8
          %s241 = scalar_lea.vmem %s0, %s240
        $region36: #{tpu_custom_call.1} parent=31 // pred_fallthru
          _
        // Predicated region
        $region37: #{tpu_custom_call.1} parent=31 // pred_check
          %p242 = pneg %p62
        $region38: #{tpu_custom_call.1} parent=31 // pred_check_branch
          %244 = sbr.rel (%p242) target = $region40
        $region39: #{tpu_custom_call.1} parent=31 // pred_region
          %s245 = smul.u32 8, %s16
          %p246 = scmp.lt.s32.totalorder %s245, 15
          %s247 = scalar_select %p246, %s245, 15
          %s248 = smul.addr %s247, 8
          %s249 = scalar_lea.vmem %s1, %s248
          %s250 = smul.u32 8, %s16
        $region40: #{tpu_custom_call.1} parent=31 // pred_fallthru
          _
        // Predicated region
        $region41: #{tpu_custom_call.1} parent=31 // pred_check
          %p251 = pneg %p88
        $region42: #{tpu_custom_call.1} parent=31 // pred_check_branch
          %253 = sbr.rel (%p251) target = $region44
        $region43: #{tpu_custom_call.1} parent=31 // pred_region
          %p254 = scmp.lt.s32.totalorder %s16, 1
          %s255 = scalar_select %p254, %s16, 1
          %s256 = smul.addr %s255, 8
          %s257 = scalar_lea.vmem %s2, %s256
        $region44: #{tpu_custom_call.1} parent=31 // pred_fallthru
          _
      $region32: #{tpu_custom_call.1} parent=5 // pred_fallthru
        _
      %p258 = scmp.le.s32.totalorder 1, %s16
      %p259 = scmp.lt.s32.totalorder %s16, 3
      %p260 = pnand %p258, %p259
      %p261 = pneg %p260
      // Predicated region
      $region45: #{tpu_custom_call.1} parent=5 // pred_check
        _
      $region46: #{tpu_custom_call.1} parent=5 // pred_check_branch
        %263 = sbr.rel (%p260) target = $region48
      $region47: #{tpu_custom_call.1} parent=5 // pred_region
        %s264 = ssub.s32 %s16, 1
        %p265 = scmp.lt.s32.totalorder %s21, 1
        %s266 = scalar_select %p265, %s21, 1
        %s267 = smul.addr %s266, 8
        %s268 = scalar_lea.vmem %s0, %s267
        %p269 = pneg %p42
        %p270 = pneg %p39
        %s271 = smul.u32 8, %s21
        %p272 = scmp.lt.s32.totalorder %s271, 15
        %s273 = scalar_select %p272, %s271, 15
        %s274 = smul.addr %s273, 8
        %s275 = scalar_lea.vmem %s1, %s274
        %p276 = pneg %p68
        %p277 = pneg %p65
        %p278 = scmp.lt.s32.totalorder %s21, 1
        %s279 = scalar_select %p278, %s21, 1
        %s280 = smul.addr %s279, 8
        %s281 = scalar_lea.vmem %s2, %s280
        %p282 = pneg %p94
        %p283 = pneg %p91
        %p284 = pneg %p115
        %p285 = pneg %p112
        %p286 = pneg %p136
        %p287 = pneg %p133
        %p288 = pneg %p157
        %p289 = pneg %p154
        %p290 = pneg %p178
        %p291 = pneg %p175
        %p292 = pneg %p204
        %p293 = pneg %p201
        %s294 = sand.u32 %s191, 1
        %s295 = scalar_lea.sflag [#allocation3], %s294
        %s296 = sand.u32 %s191, 1
        %s297 = smul.addr %s296, 8
        %s298 = scalar_lea.vmem [#allocation2], %s297
        %p299 = scmp.lt.s32.totalorder %s21, 1
        %s300 = scalar_select %p299, %s21, 1
        %s301 = smul.addr %s300, 8
        %s302 = scalar_lea.vmem %s0, %s301
        %s303 = smul.u32 8, %s21
        %p304 = scmp.lt.s32.totalorder %s303, 15
        %s305 = scalar_select %p304, %s303, 15
        %s306 = smul.addr %s305, 8
        %s307 = scalar_lea.vmem %s1, %s306
        %s308 = smul.u32 8, %s21
        %p309 = scmp.lt.s32.totalorder %s21, 1
        %s310 = scalar_select %p309, %s21, 1
        %s311 = smul.addr %s310, 8
        %s312 = scalar_lea.vmem %s2, %s311
        %v313 = vld [vmem:[%s302] sm:$0xff]
        %v314 = vld [vmem:[%s307] sm:$0xff]
        %v315 = vld [vmem:[%s307 + $0x8] sm:$0xff]
        %v316 = vld [vmem:[%s307 + $0x10] sm:$0xff]
        %v317 = vld [vmem:[%s307 + $0x18] sm:$0xff]
        %v318 = vld [vmem:[%s307 + $0x20] sm:$0xff]
        %v319 = vld [vmem:[%s307 + $0x28] sm:$0xff]
        %v320 = vld [vmem:[%s307 + $0x30] sm:$0xff]
        %v321 = vld [vmem:[%s307 + $0x38] sm:$0xff]
        %v322 = vld [vmem:[%s3] sm:$0xff]
        %v323 = vld [vmem:[%s3 + $0x8] sm:$0xff]
        %v324 = vld [vmem:[%s3 + $0x10] sm:$0xff]
        %v325 = vld [vmem:[%s3 + $0x18] sm:$0xff]
        %v326 = vld [vmem:[%s4] sm:$0xff]
        %v327 = vld [vmem:[%s4 + $0x8] sm:$0xff]
        %v328 = vld [vmem:[%s4 + $0x10] sm:$0xff]
        %v329 = vld [vmem:[%s4 + $0x18] sm:$0xff]
        %vm330 = vcmask 261120
        %v332 = vsel %vm330, %v314, 0
        %v335 = vsel %vm330, %v315, 0
        %v338 = vsel %vm330, %v316, 0
        %v341 = vsel %vm330, %v317, 0
        %v344 = vsel %vm330, %v318, 0
        %v347 = vsel %vm330, %v319, 0
        %v350 = vsel %vm330, %v320, 0
        %v353 = vsel %vm330, %v321, 0
        %355 = vmatpush.msra.mxu0 0.0
        %356 = vmatpush.msra.mxu0 0.0
        %357 = vmatpush.msra.mxu0 0.0
        %358 = vmatpush.msra.mxu0 0.0
        %359 = vmatpush.msra.mxu0 0.0
        %360 = vmatpush.msra.mxu0 0.0
        %361 = vmatpush.msra.mxu0 0.0
        %362 = vmatpush.msra.mxu0 0.0
        %363 = vmatpush.msra.mxu0 0.0
        %364 = vmatpush.msra.mxu0 0.0
        %365 = vmatpush.msra.mxu0 0.0
        %366 = vmatpush.msra.mxu0 0.0
        %367 = vmatpush.msra.mxu0 %v325
        %368 = vmatpush.msra.mxu0 %v324
        %369 = vmatpush.msra.mxu0 %v323
        %370 = vmatpush.msra.mxu0 %v322
        %371 = vmatmul.f32.gmra.mxu0 %v332
        %v372 = vpop.f32.mrf.mxu0
        %v373 = vadd.f32 0.0, %v372
        %374 = vmatmul.f32.gmra.mxu0 %v335
        %v375 = vpop.f32.mrf.mxu0
        %v376 = vadd.f32 0.0, %v375
        %377 = vmatmul.f32.gmra.mxu0 %v338
        %v378 = vpop.f32.mrf.mxu0
        %v379 = vadd.f32 0.0, %v378
        %380 = vmatmul.f32.gmra.mxu0 %v341
        %v381 = vpop.f32.mrf.mxu0
        %v382 = vadd.f32 0.0, %v381
        %383 = vmatmul.f32.gmra.mxu0 %v344
        %v384 = vpop.f32.mrf.mxu0
        %v385 = vadd.f32 0.0, %v384
        %386 = vmatmul.f32.gmra.mxu0 %v347
        %v387 = vpop.f32.mrf.mxu0
        %v388 = vadd.f32 0.0, %v387
        %389 = vmatmul.f32.gmra.mxu0 %v350
        %v390 = vpop.f32.mrf.mxu0
        %v391 = vadd.f32 0.0, %v390
        %392 = vmatmul.f32.gmra.mxu0 %v353
        %v393 = vpop.f32.mrf.mxu0
        %v394 = vadd.f32 0.0, %v393
        %395 = vdwg.mxu0
        %v396 = vtanh.pop %v373
        %v397 = vtanh.pop %v376
        %v398 = vtanh.pop %v379
        %v399 = vtanh.pop %v382
        %v400 = vtanh.pop %v385
        %v401 = vtanh.pop %v388
        %v402 = vtanh.pop %v391
        %v403 = vtanh.pop %v394
        %v405 = vsel %vm330, %v396, 0
        %v408 = vsel %vm330, %v397, 0
        %v411 = vsel %vm330, %v398, 0
        %v414 = vsel %vm330, %v399, 0
        %v417 = vsel %vm330, %v400, 0
        %v420 = vsel %vm330, %v401, 0
        %v423 = vsel %vm330, %v402, 0
        %v426 = vsel %vm330, %v403, 0
        %428 = vmatpush.msra.mxu0 0.0
        %429 = vmatpush.msra.mxu0 0.0
        %430 = vmatpush.msra.mxu0 0.0
        %431 = vmatpush.msra.mxu0 0.0
        %432 = vmatpush.msra.mxu0 0.0
        %433 = vmatpush.msra.mxu0 0.0
        %434 = vmatpush.msra.mxu0 0.0
        %435 = vmatpush.msra.mxu0 0.0
        %436 = vmatpush.msra.mxu0 0.0
        %437 = vmatpush.msra.mxu0 0.0
        %438 = vmatpush.msra.mxu0 0.0
        %439 = vmatpush.msra.mxu0 0.0
        %440 = vmatpush.msra.mxu0 %v329
        %441 = vmatpush.msra.mxu0 %v328
        %442 = vmatpush.msra.mxu0 %v327
        %443 = vmatpush.msra.mxu0 %v326
        %444 = vmatmul.f32.gmra.mxu0 %v405
        %v445 = vpop.f32.mrf.mxu0
        %v446 = vadd.f32 0.0, %v445
        %447 = vmatmul.f32.gmra.mxu0 %v408
        %v448 = vpop.f32.mrf.mxu0
        %v449 = vadd.f32 0.0, %v448
        %450 = vmatmul.f32.gmra.mxu0 %v411
        %v451 = vpop.f32.mrf.mxu0
        %v452 = vadd.f32 0.0, %v451
        %453 = vmatmul.f32.gmra.mxu0 %v414
        %v454 = vpop.f32.mrf.mxu0
        %v455 = vadd.f32 0.0, %v454
        %456 = vmatmul.f32.gmra.mxu0 %v417
        %v457 = vpop.f32.mrf.mxu0
        %v458 = vadd.f32 0.0, %v457
        %459 = vmatmul.f32.gmra.mxu0 %v420
        %v460 = vpop.f32.mrf.mxu0
        %v461 = vadd.f32 0.0, %v460
        %462 = vmatmul.f32.gmra.mxu0 %v423
        %v463 = vpop.f32.mrf.mxu0
        %v464 = vadd.f32 0.0, %v463
        %465 = vmatmul.f32.gmra.mxu0 %v426
        %v466 = vpop.f32.mrf.mxu0
        %v467 = vadd.f32 0.0, %v466
        %468 = vdwg.mxu0
        %v470 = vsel %vm330, %v313, 0
        %472 = vmatpush.msra.mxu0 0.0
        %473 = vmatpush.msra.mxu0 0.0
        %474 = vmatpush.msra.mxu0 0.0
        %475 = vmatpush.msra.mxu0 0.0
        %476 = vmatpush.msra.mxu0 0.0
        %477 = vmatpush.msra.mxu0 0.0
        %478 = vmatpush.msra.mxu0 0.0
        %479 = vmatpush.msra.mxu0 0.0
        %480 = vmatpush.msra.mxu0 0.0
        %481 = vmatpush.msra.mxu0 0.0
        %482 = vmatpush.msra.mxu0 0.0
        %483 = vmatpush.msra.mxu0 0.0
        %484 = vmatpush.msra.mxu0 %v325
        %485 = vmatpush.msra.mxu0 %v324
        %486 = vmatpush.msra.mxu0 %v323
        %487 = vmatpush.msra.mxu0 %v322
        %488 = vmatmul.f32.gmra.mxu0 %v470
        %v489 = vpop.f32.mrf.mxu0
        %v490 = vadd.f32 0.0, %v489
        %491 = vdwg.mxu0
        %v492 = vtanh.pop %v490
        %v494 = vsel %vm330, %v492, 0
        %496 = vmatpush.msra.mxu0 0.0
        %497 = vmatpush.msra.mxu0 0.0
        %498 = vmatpush.msra.mxu0 0.0
        %499 = vmatpush.msra.mxu0 0.0
        %500 = vmatpush.msra.mxu0 0.0
        %501 = vmatpush.msra.mxu0 0.0
        %502 = vmatpush.msra.mxu0 0.0
        %503 = vmatpush.msra.mxu0 0.0
        %504 = vmatpush.msra.mxu0 0.0
        %505 = vmatpush.msra.mxu0 0.0
        %506 = vmatpush.msra.mxu0 0.0
        %507 = vmatpush.msra.mxu0 0.0
        %508 = vmatpush.msra.mxu0 %v329
        %509 = vmatpush.msra.mxu0 %v328
        %510 = vmatpush.msra.mxu0 %v327
        %511 = vmatpush.msra.mxu0 %v326
        %512 = vmatmul.f32.gmra.mxu0 %v494
        %v513 = vpop.f32.mrf.mxu0
        %v514 = vadd.f32 0.0, %v513
        %515 = vdwg.mxu0
        %v517 = vrot.slane %v514, 1
        %v518 = vrot.slane %v514, 2
        %v519 = vrot.slane %v514, 3
        %v520 = vrot.slane %v514, 4
        %v521 = vrot.slane %v514, 5
        %v522 = vrot.slane %v514, 6
        %v523 = vrot.slane %v514, 7
        %v524 = vperm.slane %v514, 0
        %v525 = vperm.slane %v517, 0
        %v526 = vperm.slane %v518, 0
        %v527 = vperm.slane %v519, 0
        %v528 = vperm.slane %v520, 0
        %v529 = vperm.slane %v521, 0
        %v530 = vperm.slane %v522, 0
        %v531 = vperm.slane %v523, 0
        %v540 = vmul.f32 %v446, %v524
        %v541 = vmul.f32 %v449, %v525
        %v542 = vmul.f32 %v452, %v526
        %v543 = vmul.f32 %v455, %v527
        %v544 = vmul.f32 %v458, %v528
        %v545 = vmul.f32 %v461, %v529
        %v546 = vmul.f32 %v464, %v530
        %v547 = vmul.f32 %v467, %v531
        %v548 = vsel %vm330, %v540, 0.0
        %549 = vadd.xlane.f32.xlu0 %v548
        %v550 = vpop.xlane.xlu0 %549
        %v551 = vsel %vm330, %v541, 0.0
        %552 = vadd.xlane.f32.xlu0 %v551
        %v553 = vpop.xlane.xlu0 %552
        %v554 = vsel %vm330, %v542, 0.0
        %555 = vadd.xlane.f32.xlu0 %v554
        %v556 = vpop.xlane.xlu0 %555
        %v557 = vsel %vm330, %v543, 0.0
        %558 = vadd.xlane.f32.xlu0 %v557
        %v559 = vpop.xlane.xlu0 %558
        %v560 = vsel %vm330, %v544, 0.0
        %561 = vadd.xlane.f32.xlu0 %v560
        %v562 = vpop.xlane.xlu0 %561
        %v563 = vsel %vm330, %v545, 0.0
        %564 = vadd.xlane.f32.xlu0 %v563
        %v565 = vpop.xlane.xlu0 %564
        %v566 = vsel %vm330, %v546, 0.0
        %567 = vadd.xlane.f32.xlu0 %v566
        %v568 = vpop.xlane.xlu0 %567
        %v569 = vsel %vm330, %v547, 0.0
        %570 = vadd.xlane.f32.xlu0 %v569
        %v571 = vpop.xlane.xlu0 %570
        %v572 = vld [vmem:[%s312] sm:$0xff]
        %v573 = vmul.f32 %v572, -9999999.0
        %v575 = vperm.slane %v573, 0
        %v576 = vlaneseq
        %v577 = vshrl.u32 %v576, 7
        %579 = vset.pattern.permute.xlu0 %v577
        %580 = vperm.xlu0 %579, %v575
        %v581 = vpop.permute.xlu0 %580
        %v582 = vperm.slane %v573, 1
        %v583 = vlaneseq
        %v584 = vshrl.u32 %v583, 7
        %586 = vset.pattern.permute.xlu0 %v584
        %587 = vperm.xlu0 %586, %v582
        %v588 = vpop.permute.xlu0 %587
        %v589 = vperm.slane %v573, 2
        %v590 = vlaneseq
        %v591 = vshrl.u32 %v590, 7
        %593 = vset.pattern.permute.xlu0 %v591
        %594 = vperm.xlu0 %593, %v589
        %v595 = vpop.permute.xlu0 %594
        %v596 = vperm.slane %v573, 3
        %v597 = vlaneseq
        %v598 = vshrl.u32 %v597, 7
        %600 = vset.pattern.permute.xlu0 %v598
        %601 = vperm.xlu0 %600, %v596
        %v602 = vpop.permute.xlu0 %601
        %v603 = vperm.slane %v573, 4
        %v604 = vlaneseq
        %v605 = vshrl.u32 %v604, 7
        %607 = vset.pattern.permute.xlu0 %v605
        %608 = vperm.xlu0 %607, %v603
        %v609 = vpop.permute.xlu0 %608
        %v610 = vperm.slane %v573, 5
        %v611 = vlaneseq
        %v612 = vshrl.u32 %v611, 7
        %614 = vset.pattern.permute.xlu0 %v612
        %615 = vperm.xlu0 %614, %v610
        %v616 = vpop.permute.xlu0 %615
        %v617 = vperm.slane %v573, 6
        %v618 = vlaneseq
        %v619 = vshrl.u32 %v618, 7
        %621 = vset.pattern.permute.xlu0 %v619
        %622 = vperm.xlu0 %621, %v617
        %v623 = vpop.permute.xlu0 %622
        %v624 = vperm.slane %v573, 7
        %v625 = vlaneseq
        %v626 = vshrl.u32 %v625, 7
        %628 = vset.pattern.permute.xlu0 %v626
        %629 = vperm.xlu0 %628, %v624
        %v630 = vpop.permute.xlu0 %629
        %v639 = vadd.f32 %v550, %v581
        %v640 = vadd.f32 %v553, %v588
        %v641 = vadd.f32 %v556, %v595
        %v642 = vadd.f32 %v559, %v602
        %v643 = vadd.f32 %v562, %v609
        %v644 = vadd.f32 %v565, %v616
        %v645 = vadd.f32 %v568, %v623
        %v646 = vadd.f32 %v571, %v630
        %655 = vset.pattern.permute.xlu0 0
        %656 = vperm.xlu0 %655, %v639
        %v657 = vpop.permute.xlu0 %656
        %658 = vset.pattern.permute.xlu0 0
        %659 = vperm.xlu0 %658, %v640
        %v660 = vpop.permute.xlu0 %659
        %661 = vset.pattern.permute.xlu0 0
        %662 = vperm.xlu0 %661, %v641
        %v663 = vpop.permute.xlu0 %662
        %664 = vset.pattern.permute.xlu0 0
        %665 = vperm.xlu0 %664, %v642
        %v666 = vpop.permute.xlu0 %665
        %667 = vset.pattern.permute.xlu0 0
        %668 = vperm.xlu0 %667, %v643
        %v669 = vpop.permute.xlu0 %668
        %670 = vset.pattern.permute.xlu0 0
        %671 = vperm.xlu0 %670, %v644
        %v672 = vpop.permute.xlu0 %671
        %673 = vset.pattern.permute.xlu0 0
        %674 = vperm.xlu0 %673, %v645
        %v675 = vpop.permute.xlu0 %674
        %676 = vset.pattern.permute.xlu0 0
        %677 = vperm.xlu0 %676, %v646
        %v678 = vpop.permute.xlu0 %677
        %v679 = vlaneseq
        %v680 = vand.u32 %v679, 127
        %v681 = vperm.slane %v657, %v680
        %v682 = vperm.slane %v660, %v680
        %v683 = vperm.slane %v663, %v680
        %v684 = vperm.slane %v666, %v680
        %v685 = vperm.slane %v669, %v680
        %v686 = vperm.slane %v672, %v680
        %v687 = vperm.slane %v675, %v680
        %v688 = vperm.slane %v678, %v680
        %vm689 = vcmask 1041409
        %v690 = vsel %vm689, %v682, %v681
        %vm691 = vcmask 1042434
        %v692 = vsel %vm691, %v683, %v690
        %vm693 = vcmask 1043459
        %v694 = vsel %vm693, %v684, %v692
        %vm695 = vcmask 1044484
        %v696 = vsel %vm695, %v685, %v694
        %vm697 = vcmask 1045509
        %v698 = vsel %vm697, %v686, %v696
        %vm699 = vcmask 1046534
        %v700 = vsel %vm699, %v687, %v698
        %vm701 = vcmask 1047559
        %v702 = vsel %vm701, %v688, %v700
        %vm704 = vcmask 64512
        %v705 = vsel %vm704, %v702, -inf
        %706 = vmax.xlane.f32.xlu0 %v705
        %v707 = vpop.xlane.xlu0 %706
        %v709 = vperm.slane %v707, 0
        %v710 = vperm.slane %v707, 1
        %v711 = vperm.slane %v707, 2
        %v712 = vperm.slane %v707, 3
        %v713 = vperm.slane %v707, 4
        %v714 = vperm.slane %v707, 5
        %v715 = vperm.slane %v707, 6
        %v716 = vperm.slane %v707, 7
        %v725 = vsub.f32 %v639, %v709
        %v726 = vsub.f32 %v640, %v710
        %v727 = vsub.f32 %v641, %v711
        %v728 = vsub.f32 %v642, %v712
        %v729 = vsub.f32 %v643, %v713
        %v730 = vsub.f32 %v644, %v714
        %v731 = vsub.f32 %v645, %v715
        %v732 = vsub.f32 %v646, %v716
        %v733 = vmul.f32 %v725, 1.442695
        %v734 = vpow.pop %v733
        %v735 = vmul.f32 %v726, 1.442695
        %v736 = vpow.pop %v735
        %v737 = vmul.f32 %v727, 1.442695
        %v738 = vpow.pop %v737
        %v739 = vmul.f32 %v728, 1.442695
        %v740 = vpow.pop %v739
        %v741 = vmul.f32 %v729, 1.442695
        %v742 = vpow.pop %v741
        %v743 = vmul.f32 %v730, 1.442695
        %v744 = vpow.pop %v743
        %v745 = vmul.f32 %v731, 1.442695
        %v746 = vpow.pop %v745
        %v747 = vmul.f32 %v732, 1.442695
        %v748 = vpow.pop %v747
        %757 = vset.pattern.permute.xlu0 0
        %758 = vperm.xlu0 %757, %v734
        %v759 = vpop.permute.xlu0 %758
        %760 = vset.pattern.permute.xlu0 0
        %761 = vperm.xlu0 %760, %v736
        %v762 = vpop.permute.xlu0 %761
        %763 = vset.pattern.permute.xlu0 0
        %764 = vperm.xlu0 %763, %v738
        %v765 = vpop.permute.xlu0 %764
        %766 = vset.pattern.permute.xlu0 0
        %767 = vperm.xlu0 %766, %v740
        %v768 = vpop.permute.xlu0 %767
        %769 = vset.pattern.permute.xlu0 0
        %770 = vperm.xlu0 %769, %v742
        %v771 = vpop.permute.xlu0 %770
        %772 = vset.pattern.permute.xlu0 0
        %773 = vperm.xlu0 %772, %v744
        %v774 = vpop.permute.xlu0 %773
        %775 = vset.pattern.permute.xlu0 0
        %776 = vperm.xlu0 %775, %v746
        %v777 = vpop.permute.xlu0 %776
        %778 = vset.pattern.permute.xlu0 0
        %779 = vperm.xlu0 %778, %v748
        %v780 = vpop.permute.xlu0 %779
        %v781 = vperm.slane %v759, %v680
        %v782 = vperm.slane %v762, %v680
        %v783 = vperm.slane %v765, %v680
        %v784 = vperm.slane %v768, %v680
        %v785 = vperm.slane %v771, %v680
        %v786 = vperm.slane %v774, %v680
        %v787 = vperm.slane %v777, %v680
        %v788 = vperm.slane %v780, %v680
        %v789 = vsel %vm689, %v782, %v781
        %v790 = vsel %vm691, %v783, %v789
        %v791 = vsel %vm693, %v784, %v790
        %v792 = vsel %vm695, %v785, %v791
        %v793 = vsel %vm697, %v786, %v792
        %v794 = vsel %vm699, %v787, %v793
        %v795 = vsel %vm701, %v788, %v794
        %v797 = vsel %vm704, %v795, 0.0
        %798 = vadd.xlane.f32.xlu0 %v797
        %v799 = vpop.xlane.xlu0 %798
        %v800 = vrcp.pop %v799
        %v802 = vperm.slane %v800, 0
        %v803 = vperm.slane %v800, 1
        %v804 = vperm.slane %v800, 2
        %v805 = vperm.slane %v800, 3
        %v806 = vperm.slane %v800, 4
        %v807 = vperm.slane %v800, 5
        %v808 = vperm.slane %v800, 6
        %v809 = vperm.slane %v800, 7
        %v818 = vmul.f32 %v734, %v802
        %v819 = vmul.f32 %v736, %v803
        %v820 = vmul.f32 %v738, %v804
        %v821 = vmul.f32 %v740, %v805
        %v822 = vmul.f32 %v742, %v806
        %v823 = vmul.f32 %v744, %v807
        %v824 = vmul.f32 %v746, %v808
        %v825 = vmul.f32 %v748, %v809
        %827 = vset.pattern.permute.xlu0 0
        %828 = vperm.xlu0 %827, %v818
        %v829 = vpop.permute.xlu0 %828
        %832 = vset.pattern.permute.xlu0 0
        %833 = vperm.xlu0 %832, %v819
        %v834 = vpop.permute.xlu0 %833
        %837 = vset.pattern.permute.xlu0 0
        %838 = vperm.xlu0 %837, %v820
        %v839 = vpop.permute.xlu0 %838
        %842 = vset.pattern.permute.xlu0 0
        %843 = vperm.xlu0 %842, %v821
        %v844 = vpop.permute.xlu0 %843
        %847 = vset.pattern.permute.xlu0 0
        %848 = vperm.xlu0 %847, %v822
        %v849 = vpop.permute.xlu0 %848
        %852 = vset.pattern.permute.xlu0 0
        %853 = vperm.xlu0 %852, %v823
        %v854 = vpop.permute.xlu0 %853
        %857 = vset.pattern.permute.xlu0 0
        %858 = vperm.xlu0 %857, %v824
        %v859 = vpop.permute.xlu0 %858
        %862 = vset.pattern.permute.xlu0 0
        %863 = vperm.xlu0 %862, %v825
        %v864 = vpop.permute.xlu0 %863
        %v866 = vmul.f32 %v829, %v314
        %v867 = vmul.f32 %v834, %v315
        %v868 = vmul.f32 %v839, %v316
        %v869 = vmul.f32 %v844, %v317
        %v870 = vmul.f32 %v849, %v318
        %v871 = vmul.f32 %v854, %v319
        %v872 = vmul.f32 %v859, %v320
        %v873 = vmul.f32 %v864, %v321
        %v874 = vsel %vm330, %v866, 0.0
        %v875 = vrot.slane %v874, 4
        %v876 = vadd.f32 %v874, %v875
        %v877 = vrot.slane %v876, 2
        %v878 = vadd.f32 %v876, %v877
        %v879 = vrot.slane %v878, 1
        %v880 = vadd.f32 %v878, %v879
        %v881 = vsel %vm330, %v867, 0.0
        %v882 = vrot.slane %v881, 4
        %v883 = vadd.f32 %v881, %v882
        %v884 = vrot.slane %v883, 2
        %v885 = vadd.f32 %v883, %v884
        %v886 = vrot.slane %v885, 1
        %v887 = vadd.f32 %v885, %v886
        %v888 = vsel %vm330, %v868, 0.0
        %v889 = vrot.slane %v888, 4
        %v890 = vadd.f32 %v888, %v889
        %v891 = vrot.slane %v890, 2
        %v892 = vadd.f32 %v890, %v891
        %v893 = vrot.slane %v892, 1
        %v894 = vadd.f32 %v892, %v893
        %v895 = vsel %vm330, %v869, 0.0
        %v896 = vrot.slane %v895, 4
        %v897 = vadd.f32 %v895, %v896
        %v898 = vrot.slane %v897, 2
        %v899 = vadd.f32 %v897, %v898
        %v900 = vrot.slane %v899, 1
        %v901 = vadd.f32 %v899, %v900
        %v902 = vsel %vm330, %v870, 0.0
        %v903 = vrot.slane %v902, 4
        %v904 = vadd.f32 %v902, %v903
        %v905 = vrot.slane %v904, 2
        %v906 = vadd.f32 %v904, %v905
        %v907 = vrot.slane %v906, 1
        %v908 = vadd.f32 %v906, %v907
        %v909 = vsel %vm330, %v871, 0.0
        %v910 = vrot.slane %v909, 4
        %v911 = vadd.f32 %v909, %v910
        %v912 = vrot.slane %v911, 2
        %v913 = vadd.f32 %v911, %v912
        %v914 = vrot.slane %v913, 1
        %v915 = vadd.f32 %v913, %v914
        %v916 = vsel %vm330, %v872, 0.0
        %v917 = vrot.slane %v916, 4
        %v918 = vadd.f32 %v916, %v917
        %v919 = vrot.slane %v918, 2
        %v920 = vadd.f32 %v918, %v919
        %v921 = vrot.slane %v920, 1
        %v922 = vadd.f32 %v920, %v921
        %v923 = vsel %vm330, %v873, 0.0
        %v924 = vrot.slane %v923, 4
        %v925 = vadd.f32 %v923, %v924
        %v926 = vrot.slane %v925, 2
        %v927 = vadd.f32 %v925, %v926
        %v928 = vrot.slane %v927, 1
        %v929 = vadd.f32 %v927, %v928
        %v930 = vld [vmem:[%s5] sm:$0xff]
        %v931 = vld [vmem:[%s5 + $0x8] sm:$0xff]
        %v932 = vld [vmem:[%s5 + $0x10] sm:$0xff]
        %v933 = vld [vmem:[%s5 + $0x18] sm:$0xff]
        %v934 = vld [vmem:[%s6] sm:$0xff]
        %v935 = vld [vmem:[%s6 + $0x8] sm:$0xff]
        %v936 = vld [vmem:[%s6 + $0x10] sm:$0xff]
        %v937 = vld [vmem:[%s6 + $0x18] sm:$0xff]
        %v946 = vsel %vm689, %v887, %v880
        %v947 = vsel %vm691, %v894, %v946
        %v948 = vsel %vm693, %v901, %v947
        %v949 = vsel %vm695, %v908, %v948
        %v950 = vsel %vm697, %v915, %v949
        %v951 = vsel %vm699, %v922, %v950
        %v952 = vsel %vm701, %v929, %v951
        %v953 = vsel %vm330, %v952, 0
        %955 = vmatpush.msra.mxu0 0.0
        %956 = vmatpush.msra.mxu0 0.0
        %957 = vmatpush.msra.mxu0 0.0
        %958 = vmatpush.msra.mxu0 0.0
        %959 = vmatpush.msra.mxu0 0.0
        %960 = vmatpush.msra.mxu0 0.0
        %961 = vmatpush.msra.mxu0 0.0
        %962 = vmatpush.msra.mxu0 0.0
        %963 = vmatpush.msra.mxu0 0.0
        %964 = vmatpush.msra.mxu0 0.0
        %965 = vmatpush.msra.mxu0 0.0
        %966 = vmatpush.msra.mxu0 0.0
        %967 = vmatpush.msra.mxu0 %v937
        %968 = vmatpush.msra.mxu0 %v936
        %969 = vmatpush.msra.mxu0 %v935
        %970 = vmatpush.msra.mxu0 %v934
        %971 = vmatmul.f32.gmra.mxu0 %v953
        %v972 = vpop.f32.mrf.mxu0
        %v973 = vadd.f32 0.0, %v972
        %974 = vdwg.mxu0
        %975 = vmatpush.msra.mxu0 0.0
        %976 = vmatpush.msra.mxu0 0.0
        %977 = vmatpush.msra.mxu0 0.0
        %978 = vmatpush.msra.mxu0 0.0
        %979 = vmatpush.msra.mxu0 0.0
        %980 = vmatpush.msra.mxu0 0.0
        %981 = vmatpush.msra.mxu0 0.0
        %982 = vmatpush.msra.mxu0 0.0
        %983 = vmatpush.msra.mxu0 0.0
        %984 = vmatpush.msra.mxu0 0.0
        %985 = vmatpush.msra.mxu0 0.0
        %986 = vmatpush.msra.mxu0 0.0
        %987 = vmatpush.msra.mxu0 %v933
        %988 = vmatpush.msra.mxu0 %v932
        %989 = vmatpush.msra.mxu0 %v931
        %990 = vmatpush.msra.mxu0 %v930
        %991 = vmatmul.f32.gmra.mxu0 %v470
        %v992 = vpop.f32.mrf.mxu0
        %v993 = vadd.f32 %v973, %v992
        %994 = vdwg.mxu0
        %v995 = vmax.f32 %v993, 0.0
        %996 = vst.msk [vmem:[%s298] sm:$0xff] %vm330, %v995
        %s997 = sand.u32 %s191, 1
        %s998 = scalar_lea.sflag [#allocation3], %s997
        %s999 = sand.u32 %s191, 1
        %s1000 = smul.addr %s999, 8
        %s1001 = scalar_lea.vmem [#allocation2], %s1000
        // Predicated region
        $region49: #{tpu_custom_call.1} parent=47 // pred_check
          %p1002 = pneg %p201
        $region50: #{tpu_custom_call.1} parent=47 // pred_check_branch
          %1004 = sbr.rel (%p1002) target = $region52
        $region51: #{tpu_custom_call.1} parent=47 // pred_region
          %1006 = vsyncadd %s998, 0
          %s1007 = smul.addr %s21, 8
          %s1008 = scalar_lea.hbm %s7, %s1007
          %s1010 = sshll.u32 %s1001, 4
          %s1011 = int_to_ptr.vmem [resolvable:$true] %s1010
          %s1012 = sshll.u32 %s1008, 4
          %s1013 = int_to_ptr.hbm [resolvable:$true] %s1012
          %1015 = dma.vmem_to_hbm [thread:$0]  %s1011, 128, %s1013, %s998
        $region52: #{tpu_custom_call.1} parent=47 // pred_fallthru
          _
      $region48: #{tpu_custom_call.1} parent=5 // pred_fallthru
        _
      %p1016 = scmp.le.s32.totalorder 2, %s16
      // Predicated region
      $region53: #{tpu_custom_call.1} parent=5 // pred_check
        %p1017 = pneg %p1016
      $region54: #{tpu_custom_call.1} parent=5 // pred_check_branch
        %1019 = sbr.rel (%p1017) target = $region56
      $region55: #{tpu_custom_call.1} parent=5 // pred_region
        %s1020 = ssub.s32 %s16, 2
        // Predicated region
        $region57: #{tpu_custom_call.1} parent=55 // pred_check
          %p1021 = pneg %p207
        $region58: #{tpu_custom_call.1} parent=55 // pred_check_branch
          %1023 = sbr.rel (%p1021) target = $region60
        $region59: #{tpu_custom_call.1} parent=55 // pred_region
          %s1024 = sand.u32 %s192, 1
          %s1025 = scalar_lea.sflag [#allocation3], %s1024
          %s1026 = sand.u32 %s192, 1
          %s1027 = smul.addr %s1026, 8
          %s1028 = scalar_lea.vmem [#allocation2], %s1027
          %1030 = dma.done %s1025, 128
        $region60: #{tpu_custom_call.1} parent=55 // pred_fallthru
          _
      $region56: #{tpu_custom_call.1} parent=5 // pred_fallthru
        _
    $region6: #{tpu_custom_call.1} parent=1 // loop_footer
      %s20 = sadd.s32 1, %s16
    $region7: #{tpu_custom_call.1} parent=1 // loop_footer_branch
      %15 = sbr.rel target = $region3
    $region8: #{tpu_custom_call.1} parent=1 // loop_exit
      _
    %1031 = vsyncpa [#allocation3], 1
    %s1032 = scalar_lea.sflag [#allocation3], 1
    %1033 = vsyncpa %s1032, 1

</llo_original>
